<compile_context>
chip_gen: v7x
topology: tpu7x:2x2x1
jax: 0.10.0
libtpu: 0.0.40
codegen_flags: <defaults>
</compile_context>

<pallas_src>
import functools

import jax
import jax.numpy as jnp
from jax.experimental import pallas as pl
from jax.experimental.pallas import tpu as pltpu

IN_FEATURES = 4
HIDDEN = 128
N_ACTIONS = 2


def _policy_kernel(*refs, use_dropout):
    if use_dropout:
        x_ref, drop_ref, w1_ref, b1_ref, w2d_ref, b2d_ref, out_ref = refs
    else:
        x_ref, w1_ref, b1_ref, w2d_ref, b2d_ref, out_ref = refs
        drop_ref = None

    # ---- affine1 (batch on lanes): [128,4] @ [4,TB] + [128,1] -> [128,TB] ----
    h = jnp.dot(w1_ref[...], x_ref[...], preferred_element_type=jnp.float32)
    h = h + b1_ref[...]

    # ---- dropout (train mode): precomputed keep/(1-p) scale mask ----
    if use_dropout:
        h = h * drop_ref[...]

    # ---- ReLU ----
    h = jnp.maximum(h, 0.0)

    # ---- 2-class softmax via logit difference: d = z1 - z0 ----
    # [1,128] @ [128,TB] + [1,1] -> [1,TB]
    d = jnp.dot(w2d_ref[...], h, preferred_element_type=jnp.float32) + b2d_ref[...]
    e = jnp.exp(-jnp.abs(d))                       # stable sigmoid
    p1 = jnp.where(d >= 0.0, 1.0, e) / (1.0 + e)   # softmax prob of class 1
    p0 = 1.0 - p1                                  # rows sum to 1 by construction
    out_ref[...] = jnp.concatenate([p0, p1], axis=0).astype(out_ref.dtype)


def _tile_and_pad(batch, tile_b):
    """Pick a lane tile (multiple of 128) and the padded batch size."""
    bp128 = ((batch + 127) // 128) * 128
    tb = min(tile_b, bp128)
    padded = ((batch + tb - 1) // tb) * tb
    return tb, padded


def policy_forward(x, w1, b1, w2, b2, *, p, key=None, training=True, tile_b=1024):
    """softmax(affine2(relu(dropout_p(affine1(x)))), dim=1).

    x: [B, 4];  w1: [128, 4];  b1: [128];  w2: [2, 128];  b2: [2]  (torch layout).
    Returns [B, 2] float32 probabilities.
    """
    B = x.shape[0]
    tb, Bp = _tile_and_pad(B, tile_b)
    grid = (Bp // tb,)

    # Batch-on-lanes layout: x^T padded to [4, Bp]; small weight preprocessing.
    x_t = jnp.pad(x.astype(jnp.float32).T, ((0, 0), (0, Bp - B)))
    b1_2d = b1.reshape(HIDDEN, 1).astype(jnp.float32)
    w2d = (w2[1:2, :] - w2[0:1, :]).astype(jnp.float32)        # [1, 128]
    b2d = (b2[1] - b2[0]).reshape(1, 1).astype(jnp.float32)    # [1, 1]

    use_dropout = bool(training) and float(p) > 0.0
    if use_dropout:
        if key is None:
            raise ValueError("training-mode dropout requires a PRNG key")
        keep = jax.random.bernoulli(key, 1.0 - p, (HIDDEN, Bp))
        drop = keep.astype(jnp.float32) * (1.0 / (1.0 - p))
        operands = (x_t, drop, w1.astype(jnp.float32), b1_2d, w2d, b2d)
        in_specs = [
            pl.BlockSpec((IN_FEATURES, tb), lambda i: (0, i)),   # x tile
            pl.BlockSpec((HIDDEN, tb), lambda i: (0, i)),        # dropout tile
            pl.BlockSpec((HIDDEN, IN_FEATURES), lambda i: (0, 0)),  # w1 (resident)
            pl.BlockSpec((HIDDEN, 1), lambda i: (0, 0)),         # b1 (resident)
            pl.BlockSpec((1, HIDDEN), lambda i: (0, 0)),         # w2 diff (resident)
            pl.BlockSpec((1, 1), lambda i: (0, 0)),              # b2 diff (resident)
        ]
    else:
        operands = (x_t, w1.astype(jnp.float32), b1_2d, w2d, b2d)
        in_specs = [
            pl.BlockSpec((IN_FEATURES, tb), lambda i: (0, i)),
            pl.BlockSpec((HIDDEN, IN_FEATURES), lambda i: (0, 0)),
            pl.BlockSpec((HIDDEN, 1), lambda i: (0, 0)),
            pl.BlockSpec((1, HIDDEN), lambda i: (0, 0)),
            pl.BlockSpec((1, 1), lambda i: (0, 0)),
        ]

    out_t = pl.pallas_call(
        functools.partial(_policy_kernel, use_dropout=use_dropout),
        out_shape=jax.ShapeDtypeStruct((N_ACTIONS, Bp), jnp.float32),
        grid=grid,
        in_specs=in_specs,
        out_specs=pl.BlockSpec((N_ACTIONS, tb), lambda i: (0, i)),
        compiler_params=pltpu.CompilerParams(
            dimension_semantics=("parallel",),
        ),
    )(*operands)

    return out_t[:, :B].T  # back to [B, 2]


def init_params(key):
    # Mimic torch nn.Linear default init: U(-1/sqrt(fan_in), 1/sqrt(fan_in)).
    k1, k2, k3, k4 = jax.random.split(key, 4)
    lim1 = 1.0 / (IN_FEATURES ** 0.5)
    lim2 = 1.0 / (HIDDEN ** 0.5)
    w1 = jax.random.uniform(k1, (HIDDEN, IN_FEATURES), jnp.float32, -lim1, lim1)
    b1 = jax.random.uniform(k2, (HIDDEN,), jnp.float32, -lim1, lim1)
    w2 = jax.random.uniform(k3, (N_ACTIONS, HIDDEN), jnp.float32, -lim2, lim2)
    b2 = jax.random.uniform(k4, (N_ACTIONS,), jnp.float32, -lim2, lim2)
    return w1, b1, w2, b2


if __name__ == "__main__":
    root = jax.random.PRNGKey(0)
    kx, kp, kd = jax.random.split(root, 3)
    B = 8
    p = 0.6
    x = jax.random.normal(kx, (B, IN_FEATURES), jnp.float32)
    w1, b1, w2, b2 = init_params(kp)

    # ---- training-mode forward (dropout active) ----
    probs_train = jax.block_until_ready(
        policy_forward(x, w1, b1, w2, b2, p=p, key=kd, training=True)
    )
    assert probs_train.shape == (B, N_ACTIONS)
    assert bool(jnp.all(probs_train >= 0.0))
    assert bool(jnp.all(jnp.abs(jnp.sum(probs_train, axis=1) - 1.0) < 1e-5))

    # Reference with the identical dropout mask (same key, same shape).
    _, Bp = _tile_and_pad(B, 1024)
    keep = jax.random.bernoulli(kd, 1.0 - p, (HIDDEN, Bp))
    drop_ref = keep.astype(jnp.float32) * (1.0 / (1.0 - p))
    h_tr = jnp.dot(x, w1.T, precision="highest") + b1
    h_tr = jnp.maximum(h_tr * drop_ref[:, :B].T, 0.0)
    logits_tr = jnp.dot(h_tr, w2.T, precision="highest") + b2
    ref_train = jax.nn.softmax(logits_tr, axis=1)
    assert bool(jnp.all(jnp.abs(probs_train - ref_train) < 1e-4))

    # ---- eval-mode forward (dropout = identity) vs pure-JAX reference ----
    probs_eval = jax.block_until_ready(
        policy_forward(x, w1, b1, w2, b2, p=p, training=False)
    )
    h_ev = jnp.maximum(jnp.dot(x, w1.T, precision="highest") + b1, 0.0)
    logits_ev = jnp.dot(h_ev, w2.T, precision="highest") + b2
    ref_eval = jax.nn.softmax(logits_ev, axis=1)
    assert bool(jnp.all(jnp.abs(probs_eval - ref_eval) < 1e-4))

    print("KERNEL_OK")
</pallas_src>

<mosaic_0001>
module attributes {stable_mosaic.version = 11 : i64} {
  func.func @_policy_kernel(%arg0: i32, %arg1: memref<4x128xf32, #tpu.memory_space<vmem>>, %arg2: memref<128x128xf32, #tpu.memory_space<vmem>>, %arg3: memref<128x4xf32, #tpu.memory_space<vmem>>, %arg4: memref<128x1xf32, #tpu.memory_space<vmem>>, %arg5: memref<1x128xf32, #tpu.memory_space<vmem>>, %arg6: memref<1x1xf32, #tpu.memory_space<vmem>>, %arg7: memref<2x128xf32, #tpu.memory_space<vmem>>) attributes {dimension_semantics = [#tpu.dimension_semantics<parallel>], iteration_bounds = array<i64: 1>, scalar_prefetch = 0 : i64, scratch_operands = 0 : i64, tpu.core_type = #tpu.core_type<tc>, window_params = [{transform_indices = @transform_0, window_bounds = array<i64: 4, 128>}, {transform_indices = @transform_1, window_bounds = array<i64: 128, 128>}, {pipeline_mode = #tpu.pipeline_mode<synchronous>, transform_indices = @transform_2, window_bounds = array<i64: 128, 4>}, {pipeline_mode = #tpu.pipeline_mode<synchronous>, transform_indices = @transform_3, window_bounds = array<i64: 128, 1>}, {pipeline_mode = #tpu.pipeline_mode<synchronous>, transform_indices = @transform_4, window_bounds = array<i64: 1, 128>}, {pipeline_mode = #tpu.pipeline_mode<synchronous>, transform_indices = @transform_5, window_bounds = array<i64: 1, 1>}, {transform_indices = @transform_6, window_bounds = array<i64: 2, 128>}]} {
    %c0 = arith.constant 0 : index
    %c0_0 = arith.constant 0 : index
    %0 = vector.load %arg3[%c0, %c0_0] : memref<128x4xf32, #tpu.memory_space<vmem>>, vector<128x4xf32>
    %c0_1 = arith.constant 0 : index
    %c0_2 = arith.constant 0 : index
    %1 = vector.load %arg1[%c0_1, %c0_2] : memref<4x128xf32, #tpu.memory_space<vmem>>, vector<4x128xf32>
    %cst = arith.constant dense<0.000000e+00> : vector<128x128xf32>
    %2 = tpu.matmul %0, %1, %cst {dimension_numbers = #tpu.dot_dimension_numbers<[1], [0], [0], [1], [0, 0, 1, 1], [], []>} : vector<128x4xf32>, vector<4x128xf32>, vector<128x128xf32> -> vector<128x128xf32>
    %c0_3 = arith.constant 0 : index
    %c0_4 = arith.constant 0 : index
    %3 = vector.load %arg4[%c0_3, %c0_4] : memref<128x1xf32, #tpu.memory_space<vmem>>, vector<128x1xf32>
    %4 = vector.broadcast %3 : vector<128x1xf32> to vector<128x128xf32>
    %5 = arith.addf %2, %4 : vector<128x128xf32>
    %c0_5 = arith.constant 0 : index
    %c0_6 = arith.constant 0 : index
    %6 = vector.load %arg2[%c0_5, %c0_6] : memref<128x128xf32, #tpu.memory_space<vmem>>, vector<128x128xf32>
    %7 = arith.mulf %5, %6 : vector<128x128xf32>
    %cst_7 = arith.constant 0.000000e+00 : f32
    %8 = vector.broadcast %cst_7 : f32 to vector<128x128xf32>
    %9 = arith.maximumf %7, %8 : vector<128x128xf32>
    %c0_8 = arith.constant 0 : index
    %c0_9 = arith.constant 0 : index
    %10 = vector.load %arg5[%c0_8, %c0_9] : memref<1x128xf32, #tpu.memory_space<vmem>>, vector<1x128xf32>
    %cst_10 = arith.constant dense<0.000000e+00> : vector<1x128xf32>
    %11 = tpu.matmul %10, %9, %cst_10 {dimension_numbers = #tpu.dot_dimension_numbers<[1], [0], [0], [1], [0, 0, 1, 1], [], []>} : vector<1x128xf32>, vector<128x128xf32>, vector<1x128xf32> -> vector<1x128xf32>
    %c0_11 = arith.constant 0 : index
    %c0_12 = arith.constant 0 : index
    %12 = vector.load %arg6[%c0_11, %c0_12] : memref<1x1xf32, #tpu.memory_space<vmem>>, vector<1x1xf32>
    %13 = vector.broadcast %12 : vector<1x1xf32> to vector<1x128xf32>
    %14 = arith.addf %11, %13 : vector<1x128xf32>
    %15 = math.absf %14 : vector<1x128xf32>
    %cst_13 = arith.constant 0.000000e+00 : f32
    %16 = vector.broadcast %cst_13 : f32 to vector<1x128xf32>
    %17 = arith.subf %16, %15 : vector<1x128xf32>
    %18 = math.exp %17 : vector<1x128xf32>
    %cst_14 = arith.constant 0.000000e+00 : f32
    %19 = vector.broadcast %cst_14 : f32 to vector<1x128xf32>
    %20 = arith.cmpf oge, %14, %19 : vector<1x128xf32>
    %cst_15 = arith.constant 1.000000e+00 : f32
    %21 = vector.broadcast %cst_15 : f32 to vector<1x128xf32>
    %22 = arith.select %20, %21, %18 : vector<1x128xi1>, vector<1x128xf32>
    %cst_16 = arith.constant 1.000000e+00 : f32
    %23 = vector.broadcast %cst_16 : f32 to vector<1x128xf32>
    %24 = arith.addf %23, %18 : vector<1x128xf32>
    %25 = arith.divf %22, %24 : vector<1x128xf32>
    %cst_17 = arith.constant 1.000000e+00 : f32
    %26 = vector.broadcast %cst_17 : f32 to vector<1x128xf32>
    %27 = arith.subf %26, %25 : vector<1x128xf32>
    %28 = tpu.concatenate %27, %25 in 0 : vector<1x128xf32>, vector<1x128xf32> -> vector<2x128xf32>
    %c0_18 = arith.constant 0 : index
    %c0_19 = arith.constant 0 : index
    %29 = vector.load %arg7[%c0_18, %c0_19] : memref<2x128xf32, #tpu.memory_space<vmem>>, vector<2x128xf32>
    tpu.vector_store %arg7[%c0_18, %c0_19], %28 {strides = array<i32>} : memref<2x128xf32, #tpu.memory_space<vmem>>, vector<2x128xf32>,
    return
  }
  func.func @transform_0(%arg0: i32) -> (i32, i32) {
    %c0_i32 = arith.constant 0 : i32
    %c0_i32_0 = arith.constant 0 : i32
    return %c0_i32, %arg0 : i32, i32
  }
  func.func @transform_1(%arg0: i32) -> (i32, i32) {
    %c0_i32 = arith.constant 0 : i32
    %c0_i32_0 = arith.constant 0 : i32
    return %c0_i32, %arg0 : i32, i32
  }
  func.func @transform_2(%arg0: i32) -> (i32, i32) {
    %c0_i32 = arith.constant 0 : i32
    %c0_i32_0 = arith.constant 0 : i32
    %c0_i32_1 = arith.constant 0 : i32
    return %c0_i32, %c0_i32_0 : i32, i32
  }
  func.func @transform_3(%arg0: i32) -> (i32, i32) {
    %c0_i32 = arith.constant 0 : i32
    %c0_i32_0 = arith.constant 0 : i32
    %c0_i32_1 = arith.constant 0 : i32
    return %c0_i32, %c0_i32_0 : i32, i32
  }
  func.func @transform_4(%arg0: i32) -> (i32, i32) {
    %c0_i32 = arith.constant 0 : i32
    %c0_i32_0 = arith.constant 0 : i32
    %c0_i32_1 = arith.constant 0 : i32
    return %c0_i32, %c0_i32_0 : i32, i32
  }
  func.func @transform_5(%arg0: i32) -> (i32, i32) {
    %c0_i32 = arith.constant 0 : i32
    %c0_i32_0 = arith.constant 0 : i32
    %c0_i32_1 = arith.constant 0 : i32
    return %c0_i32, %c0_i32_0 : i32, i32
  }
  func.func @transform_6(%arg0: i32) -> (i32, i32) {
    %c0_i32 = arith.constant 0 : i32
    %c0_i32_0 = arith.constant 0 : i32
    return %c0_i32, %arg0 : i32, i32
  }
}

</mosaic_0001>

<llo_original>
// kernel: tpu_custom_call.1
$region0: #{tpu_custom_call.1}
  #allocation0 [shape = 'u32[]', space=smem, size = 0x4, offset = 0x4, fixed_abs, tag = 'smem constant byte address 0x4 - core index']
  #allocation1 [shape = 'u32[144,128]{1,0:T(1,128)}', space=vmem, size = 0x12000, scoped, tag = 'internal scratch']
  #allocation2 [shape = 'f32[1,1]{1,0:T(1,128)S(1)}', space=vmem, size = 0x200, scoped, tag = 'scoped memory for tpu_custom_call.1']
  %s0 = inlined_call_operand.vmem [shape: f32[4,128], index: 0, kind: input, shape index: {}]
  %s1 = inlined_call_operand.vmem [shape: f32[128,128], index: 1, kind: input, shape index: {}]
  %s2 = inlined_call_operand.vmem [shape: f32[128,4], index: 2, kind: input, shape index: {}]
  %s3 = inlined_call_operand.vmem [shape: f32[128,1], index: 3, kind: input, shape index: {}]
  %s4 = inlined_call_operand.vmem [shape: f32[1,128], index: 4, kind: input, shape index: {}]
  %s5 = inlined_call_operand.<no memory space> [shape: f32[1,1], index: 5, kind: input, shape index: {}]
  %s6 = inlined_call_operand.hbm [shape: f32[2,128], index: 6, kind: output, shape index: {}]
  %s7 = sld [smem:[#allocation0]]
  $region34: #{tpu_custom_call.1} parent=0
    _
  %s9 = ssub.s32 1, %s7
  %s10 = scalar_select 0, %s9, %s7
  %v11 = vstv %s5
  %12 = vst [vmem:[#allocation2] sm:$0x1] %v11
  $region1: #{tpu_custom_call.1} parent=0
    #allocation3 [shape = 'u8[1024]{0}', space=vmem, size = 0x400, scoped, tag = 'output window, operand 0, single buffered']
    #allocation4 [shape = 's32[1]{0}', space=sflag, size = 0x4, scoped, tag = 'scoped memory for tpu_custom_call.1']
    %13 = vsyncpa [#allocation4], 0
    // Predicated region
    $region2: #{tpu_custom_call.1} parent=1 // pred_check
      _
    $region3: #{tpu_custom_call.1} parent=1 // pred_check_branch
      %15 = sbr.rel (0) target = $region5
    $region4: #{tpu_custom_call.1} parent=1 // pred_region
      _
    $region5: #{tpu_custom_call.1} parent=1 // pred_fallthru
      _
    // Predicated region
    $region6: #{tpu_custom_call.1} parent=1 // pred_check
      _
    $region7: #{tpu_custom_call.1} parent=1 // pred_check_branch
      %17 = sbr.rel (0) target = $region9
    $region8: #{tpu_custom_call.1} parent=1 // pred_region
      _
    $region9: #{tpu_custom_call.1} parent=1 // pred_fallthru
      _
    // Predicated region
    $region10: #{tpu_custom_call.1} parent=1 // pred_check
      _
    $region11: #{tpu_custom_call.1} parent=1 // pred_check_branch
      %19 = sbr.rel (0) target = $region13
    $region12: #{tpu_custom_call.1} parent=1 // pred_region
      _
    $region13: #{tpu_custom_call.1} parent=1 // pred_fallthru
      _
    // Predicated region
    $region14: #{tpu_custom_call.1} parent=1 // pred_check
      _
    $region15: #{tpu_custom_call.1} parent=1 // pred_check_branch
      %21 = sbr.rel (0) target = $region17
    $region16: #{tpu_custom_call.1} parent=1 // pred_region
      _
    $region17: #{tpu_custom_call.1} parent=1 // pred_fallthru
      _
    // Predicated region
    $region18: #{tpu_custom_call.1} parent=1 // pred_check
      _
    $region19: #{tpu_custom_call.1} parent=1 // pred_check_branch
      %23 = sbr.rel (0) target = $region21
    $region20: #{tpu_custom_call.1} parent=1 // pred_region
      _
    $region21: #{tpu_custom_call.1} parent=1 // pred_fallthru
      _
    // Predicated region
    $region22: #{tpu_custom_call.1} parent=1 // pred_check
      _
    $region23: #{tpu_custom_call.1} parent=1 // pred_check_branch
      %25 = sbr.rel (0) target = $region25
    $region24: #{tpu_custom_call.1} parent=1 // pred_region
      _
    $region25: #{tpu_custom_call.1} parent=1 // pred_fallthru
      _
    %v26 = vld [vmem:[%s2] sm:$0xff]
    %v27 = vld [vmem:[%s2 + $0x8] sm:$0xff]
    %v28 = vld [vmem:[%s2 + $0x10] sm:$0xff]
    %v29 = vld [vmem:[%s2 + $0x18] sm:$0xff]
    %v30 = vld [vmem:[%s2 + $0x20] sm:$0xff]
    %v31 = vld [vmem:[%s2 + $0x28] sm:$0xff]
    %v32 = vld [vmem:[%s2 + $0x30] sm:$0xff]
    %v33 = vld [vmem:[%s2 + $0x38] sm:$0xff]
    %v34 = vld [vmem:[%s2 + $0x40] sm:$0xff]
    %v35 = vld [vmem:[%s2 + $0x48] sm:$0xff]
    %v36 = vld [vmem:[%s2 + $0x50] sm:$0xff]
    %v37 = vld [vmem:[%s2 + $0x58] sm:$0xff]
    %v38 = vld [vmem:[%s2 + $0x60] sm:$0xff]
    %v39 = vld [vmem:[%s2 + $0x68] sm:$0xff]
    %v40 = vld [vmem:[%s2 + $0x70] sm:$0xff]
    %v41 = vld [vmem:[%s2 + $0x78] sm:$0xff]
    %v42 = vld [vmem:[%s0] sm:$0xf]
    %v43 = vld [vmem:[%s3] sm:$0xff]
    %v44 = vld [vmem:[%s3 + $0x8] sm:$0xff]
    %v45 = vld [vmem:[%s3 + $0x10] sm:$0xff]
    %v46 = vld [vmem:[%s3 + $0x18] sm:$0xff]
    %v47 = vld [vmem:[%s3 + $0x20] sm:$0xff]
    %v48 = vld [vmem:[%s3 + $0x28] sm:$0xff]
    %v49 = vld [vmem:[%s3 + $0x30] sm:$0xff]
    %v50 = vld [vmem:[%s3 + $0x38] sm:$0xff]
    %v51 = vld [vmem:[%s3 + $0x40] sm:$0xff]
    %v52 = vld [vmem:[%s3 + $0x48] sm:$0xff]
    %v53 = vld [vmem:[%s3 + $0x50] sm:$0xff]
    %v54 = vld [vmem:[%s3 + $0x58] sm:$0xff]
    %v55 = vld [vmem:[%s3 + $0x60] sm:$0xff]
    %v56 = vld [vmem:[%s3 + $0x68] sm:$0xff]
    %v57 = vld [vmem:[%s3 + $0x70] sm:$0xff]
    %v58 = vld [vmem:[%s3 + $0x78] sm:$0xff]
    %60 = vset.pattern.permute.xlu0 0
    %61 = vperm.xlu0 %60, %v43
    %v62 = vpop.permute.xlu0 %61
    %65 = vset.pattern.permute.xlu0 0
    %66 = vperm.xlu0 %65, %v44
    %v67 = vpop.permute.xlu0 %66
    %70 = vset.pattern.permute.xlu0 0
    %71 = vperm.xlu0 %70, %v45
    %v72 = vpop.permute.xlu0 %71
    %75 = vset.pattern.permute.xlu0 0
    %76 = vperm.xlu0 %75, %v46
    %v77 = vpop.permute.xlu0 %76
    %80 = vset.pattern.permute.xlu0 0
    %81 = vperm.xlu0 %80, %v47
    %v82 = vpop.permute.xlu0 %81
    %85 = vset.pattern.permute.xlu0 0
    %86 = vperm.xlu0 %85, %v48
    %v87 = vpop.permute.xlu0 %86
    %90 = vset.pattern.permute.xlu0 0
    %91 = vperm.xlu0 %90, %v49
    %v92 = vpop.permute.xlu0 %91
    %95 = vset.pattern.permute.xlu0 0
    %96 = vperm.xlu0 %95, %v50
    %v97 = vpop.permute.xlu0 %96
    %100 = vset.pattern.permute.xlu0 0
    %101 = vperm.xlu0 %100, %v51
    %v102 = vpop.permute.xlu0 %101
    %105 = vset.pattern.permute.xlu0 0
    %106 = vperm.xlu0 %105, %v52
    %v107 = vpop.permute.xlu0 %106
    %110 = vset.pattern.permute.xlu0 0
    %111 = vperm.xlu0 %110, %v53
    %v112 = vpop.permute.xlu0 %111
    %115 = vset.pattern.permute.xlu0 0
    %116 = vperm.xlu0 %115, %v54
    %v117 = vpop.permute.xlu0 %116
    %120 = vset.pattern.permute.xlu0 0
    %121 = vperm.xlu0 %120, %v55
    %v122 = vpop.permute.xlu0 %121
    %125 = vset.pattern.permute.xlu0 0
    %126 = vperm.xlu0 %125, %v56
    %v127 = vpop.permute.xlu0 %126
    %130 = vset.pattern.permute.xlu0 0
    %131 = vperm.xlu0 %130, %v57
    %v132 = vpop.permute.xlu0 %131
    %135 = vset.pattern.permute.xlu0 0
    %136 = vperm.xlu0 %135, %v58
    %v137 = vpop.permute.xlu0 %136
    %vm139 = vcmask 31744
    %v141 = vsel %vm139, %v26, 0
    %v144 = vsel %vm139, %v27, 0
    %v147 = vsel %vm139, %v28, 0
    %v150 = vsel %vm139, %v29, 0
    %v153 = vsel %vm139, %v30, 0
    %v156 = vsel %vm139, %v31, 0
    %v159 = vsel %vm139, %v32, 0
    %v162 = vsel %vm139, %v33, 0
    %v165 = vsel %vm139, %v34, 0
    %v168 = vsel %vm139, %v35, 0
    %v171 = vsel %vm139, %v36, 0
    %v174 = vsel %vm139, %v37, 0
    %v177 = vsel %vm139, %v38, 0
    %v180 = vsel %vm139, %v39, 0
    %v183 = vsel %vm139, %v40, 0
    %v186 = vsel %vm139, %v41, 0
    %vm188 = vcmask 1043456
    %v190 = vsel %vm188, %v42, 0
    %192 = vmatprep.subr.mxu0 0.0
    %193 = vmatpush1.msra.mxu0 %v190
    %194 = vmatprep.subr.mxu0 0.0
    %195 = vmatpush1.msra.mxu0 0.0
    %196 = vmatprep.subr.mxu0 0.0
    %197 = vmatpush1.msra.mxu0 0.0
    %198 = vmatprep.subr.mxu0 0.0
    %199 = vmatpush1.msra.mxu0 0.0
    %200 = vmatprep.subr.mxu0 0.0
    %201 = vmatpush1.msra.mxu0 0.0
    %202 = vmatprep.subr.mxu0 0.0
    %203 = vmatpush1.msra.mxu0 0.0
    %204 = vmatprep.subr.mxu0 0.0
    %205 = vmatpush1.msra.mxu0 0.0
    %206 = vmatprep.subr.mxu0 0.0
    %207 = vmatpush1.msra.mxu0 0.0
    %208 = vmatprep.subr.mxu0 0.0
    %209 = vmatpush1.msra.mxu0 0.0
    %210 = vmatprep.subr.mxu0 0.0
    %211 = vmatpush1.msra.mxu0 0.0
    %212 = vmatprep.subr.mxu0 0.0
    %213 = vmatpush1.msra.mxu0 0.0
    %214 = vmatprep.subr.mxu0 0.0
    %215 = vmatpush1.msra.mxu0 0.0
    %216 = vmatprep.subr.mxu0 0.0
    %217 = vmatpush1.msra.mxu0 0.0
    %218 = vmatprep.subr.mxu0 0.0
    %219 = vmatpush1.msra.mxu0 0.0
    %220 = vmatprep.subr.mxu0 0.0
    %221 = vmatpush1.msra.mxu0 0.0
    %222 = vmatprep.subr.mxu0 0.0
    %223 = vmatpush1.msra.mxu0 0.0
    %224 = vmatprep.subr.mxu0 0.0
    %225 = vmatpush1.msra.mxu0 0.0
    %226 = vmatprep.subr.mxu0 0.0
    %227 = vmatpush1.msra.mxu0 0.0
    %228 = vmatprep.subr.mxu0 0.0
    %229 = vmatpush1.msra.mxu0 0.0
    %230 = vmatprep.subr.mxu0 0.0
    %231 = vmatpush1.msra.mxu0 0.0
    %232 = vmatprep.subr.mxu0 0.0
    %233 = vmatpush1.msra.mxu0 0.0
    %234 = vmatprep.subr.mxu0 0.0
    %235 = vmatpush1.msra.mxu0 0.0
    %236 = vmatprep.subr.mxu0 0.0
    %237 = vmatpush1.msra.mxu0 0.0
    %238 = vmatprep.subr.mxu0 0.0
    %239 = vmatpush1.msra.mxu0 0.0
    %240 = vmatprep.subr.mxu0 0.0
    %241 = vmatpush1.msra.mxu0 0.0
    %242 = vmatprep.subr.mxu0 0.0
    %243 = vmatpush1.msra.mxu0 0.0
    %244 = vmatprep.subr.mxu0 0.0
    %245 = vmatpush1.msra.mxu0 0.0
    %246 = vmatprep.subr.mxu0 0.0
    %247 = vmatpush1.msra.mxu0 0.0
    %248 = vmatprep.subr.mxu0 0.0
    %249 = vmatpush1.msra.mxu0 0.0
    %250 = vmatprep.subr.mxu0 0.0
    %251 = vmatpush1.msra.mxu0 0.0
    %252 = vmatprep.subr.mxu0 0.0
    %253 = vmatpush1.msra.mxu0 0.0
    %254 = vmatprep.subr.mxu0 0.0
    %255 = vmatpush1.msra.mxu0 0.0
    %256 = vmatprep.mubr.f32.mxu0 0.0
    %257 = vmatmul.mubr.f32.gmra.mrb[0].mxu0 %v141
    %v258 = vpop.f32.mrb[0].mxu0
    %v259 = vadd.f32 %v62, %v258
    %v260 = vpop.f32.mrb[0].mxu0
    %261 = vmatprep.mubr.f32.mxu0 0.0
    %262 = vmatmul.mubr.f32.gmra.mrb[0].mxu0 %v144
    %v263 = vpop.f32.mrb[0].mxu0
    %v264 = vadd.f32 %v67, %v263
    %v265 = vpop.f32.mrb[0].mxu0
    %266 = vmatprep.mubr.f32.mxu0 0.0
    %267 = vmatmul.mubr.f32.gmra.mrb[0].mxu0 %v147
    %v268 = vpop.f32.mrb[0].mxu0
    %v269 = vadd.f32 %v72, %v268
    %v270 = vpop.f32.mrb[0].mxu0
    %271 = vmatprep.mubr.f32.mxu0 0.0
    %272 = vmatmul.mubr.f32.gmra.mrb[0].mxu0 %v150
    %v273 = vpop.f32.mrb[0].mxu0
    %v274 = vadd.f32 %v77, %v273
    %v275 = vpop.f32.mrb[0].mxu0
    %276 = vmatprep.mubr.f32.mxu0 0.0
    %277 = vmatmul.mubr.f32.gmra.mrb[0].mxu0 %v153
    %v278 = vpop.f32.mrb[0].mxu0
    %v279 = vadd.f32 %v82, %v278
    %v280 = vpop.f32.mrb[0].mxu0
    %281 = vmatprep.mubr.f32.mxu0 0.0
    %282 = vmatmul.mubr.f32.gmra.mrb[0].mxu0 %v156
    %v283 = vpop.f32.mrb[0].mxu0
    %v284 = vadd.f32 %v87, %v283
    %v285 = vpop.f32.mrb[0].mxu0
    %286 = vmatprep.mubr.f32.mxu0 0.0
    %287 = vmatmul.mubr.f32.gmra.mrb[0].mxu0 %v159
    %v288 = vpop.f32.mrb[0].mxu0
    %v289 = vadd.f32 %v92, %v288
    %v290 = vpop.f32.mrb[0].mxu0
    %291 = vmatprep.mubr.f32.mxu0 0.0
    %292 = vmatmul.mubr.f32.gmra.mrb[0].mxu0 %v162
    %v293 = vpop.f32.mrb[0].mxu0
    %v294 = vadd.f32 %v97, %v293
    %v295 = vpop.f32.mrb[0].mxu0
    %296 = vmatprep.mubr.f32.mxu0 0.0
    %297 = vmatmul.mubr.f32.gmra.mrb[0].mxu0 %v165
    %v298 = vpop.f32.mrb[0].mxu0
    %v299 = vadd.f32 %v102, %v298
    %v300 = vpop.f32.mrb[0].mxu0
    %301 = vmatprep.mubr.f32.mxu0 0.0
    %302 = vmatmul.mubr.f32.gmra.mrb[0].mxu0 %v168
    %v303 = vpop.f32.mrb[0].mxu0
    %v304 = vadd.f32 %v107, %v303
    %v305 = vpop.f32.mrb[0].mxu0
    %306 = vmatprep.mubr.f32.mxu0 0.0
    %307 = vmatmul.mubr.f32.gmra.mrb[0].mxu0 %v171
    %v308 = vpop.f32.mrb[0].mxu0
    %v309 = vadd.f32 %v112, %v308
    %v310 = vpop.f32.mrb[0].mxu0
    %311 = vmatprep.mubr.f32.mxu0 0.0
    %312 = vmatmul.mubr.f32.gmra.mrb[0].mxu0 %v174
    %v313 = vpop.f32.mrb[0].mxu0
    %v314 = vadd.f32 %v117, %v313
    %v315 = vpop.f32.mrb[0].mxu0
    %316 = vmatprep.mubr.f32.mxu0 0.0
    %317 = vmatmul.mubr.f32.gmra.mrb[0].mxu0 %v177
    %v318 = vpop.f32.mrb[0].mxu0
    %v319 = vadd.f32 %v122, %v318
    %v320 = vpop.f32.mrb[0].mxu0
    %321 = vmatprep.mubr.f32.mxu0 0.0
    %322 = vmatmul.mubr.f32.gmra.mrb[0].mxu0 %v180
    %v323 = vpop.f32.mrb[0].mxu0
    %v324 = vadd.f32 %v127, %v323
    %v325 = vpop.f32.mrb[0].mxu0
    %326 = vmatprep.mubr.f32.mxu0 0.0
    %327 = vmatmul.mubr.f32.gmra.mrb[0].mxu0 %v183
    %v328 = vpop.f32.mrb[0].mxu0
    %v329 = vadd.f32 %v132, %v328
    %v330 = vpop.f32.mrb[0].mxu0
    %331 = vmatprep.mubr.f32.mxu0 0.0
    %332 = vmatmul.mubr.f32.gmra.mrb[0].mxu0 %v186
    %v333 = vpop.f32.mrb[0].mxu0
    %v334 = vadd.f32 %v137, %v333
    %v335 = vpop.f32.mrb[0].mxu0
    %336 = vdwg.mxu0
    %v337 = vld [vmem:[%s1] sm:$0xff]
    %v338 = vld [vmem:[%s1 + $0x8] sm:$0xff]
    %v339 = vld [vmem:[%s1 + $0x10] sm:$0xff]
    %v340 = vld [vmem:[%s1 + $0x18] sm:$0xff]
    %v341 = vld [vmem:[%s1 + $0x20] sm:$0xff]
    %v342 = vld [vmem:[%s1 + $0x28] sm:$0xff]
    %v343 = vld [vmem:[%s1 + $0x30] sm:$0xff]
    %v344 = vld [vmem:[%s1 + $0x38] sm:$0xff]
    %v345 = vld [vmem:[%s1 + $0x40] sm:$0xff]
    %v346 = vld [vmem:[%s1 + $0x48] sm:$0xff]
    %v347 = vld [vmem:[%s1 + $0x50] sm:$0xff]
    %v348 = vld [vmem:[%s1 + $0x58] sm:$0xff]
    %v349 = vld [vmem:[%s1 + $0x60] sm:$0xff]
    %v350 = vld [vmem:[%s1 + $0x68] sm:$0xff]
    %v351 = vld [vmem:[%s1 + $0x70] sm:$0xff]
    %v352 = vld [vmem:[%s1 + $0x78] sm:$0xff]
    %v353 = vmul.f32 %v259, %v337
    %v354 = vmul.f32 %v264, %v338
    %v355 = vmul.f32 %v269, %v339
    %v356 = vmul.f32 %v274, %v340
    %v357 = vmul.f32 %v279, %v341
    %v358 = vmul.f32 %v284, %v342
    %v359 = vmul.f32 %v289, %v343
    %v360 = vmul.f32 %v294, %v344
    %v361 = vmul.f32 %v299, %v345
    %v362 = vmul.f32 %v304, %v346
    %v363 = vmul.f32 %v309, %v347
    %v364 = vmul.f32 %v314, %v348
    %v365 = vmul.f32 %v319, %v349
    %v366 = vmul.f32 %v324, %v350
    %v367 = vmul.f32 %v329, %v351
    %v368 = vmul.f32 %v334, %v352
    %v369 = vmax.f32 %v353, 0.0
    %v370 = vmax.f32 %v354, 0.0
    %v371 = vmax.f32 %v355, 0.0
    %v372 = vmax.f32 %v356, 0.0
    %v373 = vmax.f32 %v357, 0.0
    %v374 = vmax.f32 %v358, 0.0
    %v375 = vmax.f32 %v359, 0.0
    %v376 = vmax.f32 %v360, 0.0
    %v377 = vmax.f32 %v361, 0.0
    %v378 = vmax.f32 %v362, 0.0
    %v379 = vmax.f32 %v363, 0.0
    %v380 = vmax.f32 %v364, 0.0
    %v381 = vmax.f32 %v365, 0.0
    %v382 = vmax.f32 %v366, 0.0
    %v383 = vmax.f32 %v367, 0.0
    %v384 = vmax.f32 %v368, 0.0
    %v385 = vld [vmem:[%s4] sm:$0x1]
    %v386 = vld [vmem:[#allocation2] sm:$0x1]
    %388 = vset.pattern.permute.xlu0 0
    %389 = vperm.xlu0 %388, %v386
    %v390 = vpop.permute.xlu0 %389
    %v392 = vlaneseq
    %v393 = vshrl.u32 %v392, 7
    %v394 = vsub.s32 0, %v393
    %v395 = vrot.slane %v390, %v394
    %396 = vmatprep.subr.mxu0 0.0
    %397 = vmatpush1.msra.mxu0 %v369
    %398 = vmatprep.subr.mxu0 0.0
    %399 = vmatpush1.msra.mxu0 %v370
    %400 = vmatprep.subr.mxu0 0.0
    %401 = vmatpush1.msra.mxu0 %v371
    %402 = vmatprep.subr.mxu0 0.0
    %403 = vmatpush1.msra.mxu0 %v372
    %404 = vmatprep.subr.mxu0 0.0
    %405 = vmatpush1.msra.mxu0 %v373
    %406 = vmatprep.subr.mxu0 0.0
    %407 = vmatpush1.msra.mxu0 %v374
    %408 = vmatprep.subr.mxu0 0.0
    %409 = vmatpush1.msra.mxu0 %v375
    %410 = vmatprep.subr.mxu0 0.0
    %411 = vmatpush1.msra.mxu0 %v376
    %412 = vmatprep.subr.mxu0 0.0
    %413 = vmatpush1.msra.mxu0 %v377
    %414 = vmatprep.subr.mxu0 0.0
    %415 = vmatpush1.msra.mxu0 %v378
    %416 = vmatprep.subr.mxu0 0.0
    %417 = vmatpush1.msra.mxu0 %v379
    %418 = vmatprep.subr.mxu0 0.0
    %419 = vmatpush1.msra.mxu0 %v380
    %420 = vmatprep.subr.mxu0 0.0
    %421 = vmatpush1.msra.mxu0 %v381
    %422 = vmatprep.subr.mxu0 0.0
    %423 = vmatpush1.msra.mxu0 %v382
    %424 = vmatprep.subr.mxu0 0.0
    %425 = vmatpush1.msra.mxu0 %v383
    %426 = vmatprep.subr.mxu0 0.0
    %427 = vmatpush1.msra.mxu0 %v384
    %428 = vmatprep.subr.mxu0 0.0
    %429 = vmatpush1.msra.mxu0 0.0
    %430 = vmatprep.subr.mxu0 0.0
    %431 = vmatpush1.msra.mxu0 0.0
    %432 = vmatprep.subr.mxu0 0.0
    %433 = vmatpush1.msra.mxu0 0.0
    %434 = vmatprep.subr.mxu0 0.0
    %435 = vmatpush1.msra.mxu0 0.0
    %436 = vmatprep.subr.mxu0 0.0
    %437 = vmatpush1.msra.mxu0 0.0
    %438 = vmatprep.subr.mxu0 0.0
    %439 = vmatpush1.msra.mxu0 0.0
    %440 = vmatprep.subr.mxu0 0.0
    %441 = vmatpush1.msra.mxu0 0.0
    %442 = vmatprep.subr.mxu0 0.0
    %443 = vmatpush1.msra.mxu0 0.0
    %444 = vmatprep.subr.mxu0 0.0
    %445 = vmatpush1.msra.mxu0 0.0
    %446 = vmatprep.subr.mxu0 0.0
    %447 = vmatpush1.msra.mxu0 0.0
    %448 = vmatprep.subr.mxu0 0.0
    %449 = vmatpush1.msra.mxu0 0.0
    %450 = vmatprep.subr.mxu0 0.0
    %451 = vmatpush1.msra.mxu0 0.0
    %452 = vmatprep.subr.mxu0 0.0
    %453 = vmatpush1.msra.mxu0 0.0
    %454 = vmatprep.subr.mxu0 0.0
    %455 = vmatpush1.msra.mxu0 0.0
    %456 = vmatprep.subr.mxu0 0.0
    %457 = vmatpush1.msra.mxu0 0.0
    %458 = vmatprep.subr.mxu0 0.0
    %459 = vmatpush1.msra.mxu0 0.0
    %460 = vmatprep.mubr.f32.mxu0 0.0
    %461 = vmatmul.mubr.f32.gmra.mrb[0].mxu0 %v385
    %v462 = vpop.f32.mrb[0].mxu0
    %v463 = vadd.f32 %v395, %v462
    %v464 = vpop.f32.mrb[0].mxu0
    %465 = vdwg.mxu0
    %v466 = vand.u32 2147483647, %v463
    %v467 = vsub.f32 0.0, %v466
    %v468 = vmul.f32 %v467, 1.442695
    %v469 = vpow.pop %v468
    %vm470 = vcmp.ge.f32.partialorder %v463, 0.0
    %v471 = vsel %vm470, 1.0, %v469
    %v472 = vadd.f32 %v469, 1.0
    %v473 = vrcp.pop %v472
    %v474 = vmul.f32 %v471, %v473
    %v475 = vsub.f32 1.0, %v474
    %v477 = vrot.slane %v474, 7
    %vm479 = vcmask 1040384
    %v480 = vsel %vm479, %v475, %v477
    %481 = vst [vmem:[#allocation3] sm:$0x3] %v480
    // Predicated region
    $region26: #{tpu_custom_call.1} parent=1 // pred_check
      _
    $region27: #{tpu_custom_call.1} parent=1 // pred_check_branch
      %483 = sbr.rel (0) target = $region29
    $region28: #{tpu_custom_call.1} parent=1 // pred_region
      %s485 = ssub.s32 32, 32
      %486 = vsyncadd [#allocation4], %s485
      %s488 = sshll.u32 [#allocation3], 4
      %s489 = int_to_ptr.vmem [resolvable:$true] %s488
      %491 = dma.vmem_to_hbm [thread:$0]  %s489, 32, %s6, [#allocation4]
    $region29: #{tpu_custom_call.1} parent=1 // pred_fallthru
      _
    // Predicated region
    $region30: #{tpu_custom_call.1} parent=1 // pred_check
      _
    $region31: #{tpu_custom_call.1} parent=1 // pred_check_branch
      %493 = sbr.rel (0) target = $region33
    $region32: #{tpu_custom_call.1} parent=1 // pred_region
      %494 = dma.done [#allocation4], 32
    $region33: #{tpu_custom_call.1} parent=1 // pred_fallthru
      _
    %495 = vsyncpa [#allocation4], 1

</llo_original>
